<compile_context>
chip_gen: v6e
topology: v6e:2x2x1
jax: 0.10.0
libtpu: 0.0.40
codegen_flags: <defaults>
</compile_context>

<pallas_src>
import jax
import jax.numpy as jnp
from jax import lax
from jax.experimental import pallas as pl
from jax.experimental.pallas import tpu as pltpu

_LANE = 128
_GROUP = 8  # rows per batched gather/normalize/store (one f32 vreg of sublanes)


def interaction_kernel(drug_idx_ref, dis_idx_ref, drug_tab_ref, dis_tab_ref, out_ref):
    # drug_idx_ref : (P_pad,)         int32  (SMEM, scalar prefetch)
    # dis_idx_ref  : (P_pad,)         int32  (SMEM, scalar prefetch)
    # drug_tab_ref : (n_drug, E_pad)  f32    (VMEM resident across grid steps)
    # dis_tab_ref  : (n_dis,  E_pad)  f32    (VMEM resident across grid steps)
    # out_ref      : (TP, E_pad)      f32    (one pipelined, lane-dense P tile)
    tp = out_ref.shape[0]
    base = pl.program_id(0) * tp

    def do_group(g, carry):
        r0 = pl.multiple_of(g * _GROUP, _GROUP)
        # 8 independent scalar SMEM index reads + 8+8 dynamic sublane row loads per
        # table: the scheduler can co-issue sld/vld/vmul freely inside the group.
        d_rows = [drug_tab_ref[pl.ds(drug_idx_ref[base + r0 + r], 1), :]
                  for r in range(_GROUP)]
        s_rows = [dis_tab_ref[pl.ds(dis_idx_ref[base + r0 + r], 1), :]
                  for r in range(_GROUP)]
        d = jnp.concatenate(d_rows, axis=0)            # (8, E_pad)
        s = jnp.concatenate(s_rows, axis=0)            # (8, E_pad)
        prod = d * s                                   # one VPU multiply per group
        # Fused L2 normalize (padded lanes are zero, so the squared sum is unaffected).
        # F.normalize(dim=1, eps=1e-12) == x * rsqrt(max(sum(x^2), 1e-24)).
        ss = jnp.sum(prod * prod, axis=-1, keepdims=True)          # XLU reduce
        out_ref[pl.ds(r0, _GROUP), :] = prod * lax.rsqrt(jnp.maximum(ss, 1e-24))
        return carry

    lax.fori_loop(0, tp // _GROUP, do_group, 0)


def prepare_tables(w_drug, w_disease):
    """One-time setup (outside the hot path): nn.Linear weights (E, n) ->
    row-major embedding tables (n, E_pad), embedding dim zero-padded to 128 lanes."""
    emb_dim = w_drug.shape[0]
    e_pad = -(-emb_dim // _LANE) * _LANE

    def to_table(w):
        t = jnp.zeros((w.shape[1], e_pad), jnp.float32)
        return t.at[:, :emb_dim].set(w.T.astype(jnp.float32))

    return to_table(w_drug), to_table(w_disease), emb_dim


def interaction_embedding(association_pairs, drug_tab, dis_tab, emb_dim, tile_rows=512):
    """association_pairs: (2, P) int; drug_tab: (n_drug, E_pad); dis_tab: (n_dis, E_pad).

    tile_rows: rows per grid step; worth sweeping {256, 512, 1024} per generation
    (smaller on v7x when splitting across 2 TCs, larger on v5e/v6e serial grid)."""
    p = association_pairs.shape[1]
    e_pad = drug_tab.shape[1]
    n_drug = drug_tab.shape[0]
    n_dis = dis_tab.shape[0]

    # Rows per grid step: large tiles for pipelining, multiple of 8 sublanes.
    tp = tile_rows if p >= tile_rows else max(_GROUP, -(-p // _GROUP) * _GROUP)
    num_tiles = -(-p // tp)
    p_pad = num_tiles * tp

    # Pad index vectors with 0 (a valid row); padded output rows are sliced away.
    drug_idx = jnp.zeros((p_pad,), jnp.int32).at[:p].set(
        association_pairs[0].astype(jnp.int32))
    dis_idx = jnp.zeros((p_pad,), jnp.int32).at[:p].set(
        association_pairs[1].astype(jnp.int32))

    # Size the scoped-VMEM limit from the actual footprint instead of a hard-coded cap:
    # both tables (assume worst-case double-buffering), two output-tile buffers, headroom.
    # Clamp to 64 MiB (<= physical VMEM on v5e/v6e/v7x); v5e/v6e could go higher.
    table_bytes = 2 * (n_drug + n_dis) * e_pad * 4
    out_bytes = 2 * tp * e_pad * 4
    vmem_limit = int(min(max(table_bytes + out_bytes + (4 << 20), 32 << 20), 64 << 20))

    out = pl.pallas_call(
        interaction_kernel,
        out_shape=jax.ShapeDtypeStruct((p_pad, e_pad), jnp.float32),
        grid_spec=pltpu.PrefetchScalarGridSpec(
            num_scalar_prefetch=2,
            grid=(num_tiles,),
            in_specs=[
                # Constant index_map -> tables stay VMEM-resident across grid steps.
                pl.BlockSpec((n_drug, e_pad), lambda i, di, si: (0, 0)),
                pl.BlockSpec((n_dis, e_pad), lambda i, di, si: (0, 0)),
            ],
            out_specs=pl.BlockSpec((tp, e_pad), lambda i, di, si: (i, 0)),
        ),
        compiler_params=pltpu.CompilerParams(
            dimension_semantics=("parallel",),
            vmem_limit_bytes=vmem_limit,
        ),
    )(drug_idx, dis_idx, drug_tab, dis_tab)

    return out[:p, :emb_dim]


if __name__ == "__main__":
    key = jax.random.PRNGKey(0)
    k_wd, k_wdis, k_p0, k_p1 = jax.random.split(key, 4)

    n_drug, n_disease, embedding_dim, n_pairs = 16, 24, 32, 8

    # Deterministic synthetic parameters (nn.Linear weight shapes: (out, in)).
    w_drug = jax.random.normal(k_wd, (embedding_dim, n_drug), jnp.float32) * 0.1
    w_disease = jax.random.normal(k_wdis, (embedding_dim, n_disease), jnp.float32) * 0.1

    association_pairs = jnp.stack([
        jax.random.randint(k_p0, (n_pairs,), 0, n_drug, jnp.int32),
        jax.random.randint(k_p1, (n_pairs,), 0, n_disease, jnp.int32),
    ], axis=0)                                              # (2, P)

    drug_tab, dis_tab, emb_dim = prepare_tables(w_drug, w_disease)   # one-time
    out = interaction_embedding(association_pairs, drug_tab, dis_tab, emb_dim)
    out = jax.block_until_ready(out)

    # Pure-JAX reference for correctness (matches torch F.normalize eps=1e-12).
    d_ref = jnp.take(w_drug.T, association_pairs[0], axis=0)
    s_ref = jnp.take(w_disease.T, association_pairs[1], axis=0)
    prod_ref = d_ref * s_ref
    nrm_ref = jnp.maximum(jnp.linalg.norm(prod_ref, axis=1, keepdims=True), 1e-12)
    ref = prod_ref / nrm_ref

    assert out.shape == (n_pairs, embedding_dim)
    assert jnp.allclose(out, ref, atol=1e-5, rtol=1e-5)
    print("KERNEL_OK")
</pallas_src>

<mosaic_0001>
module attributes {stable_mosaic.version = 11 : i64} {
  func.func @interaction_kernel(%arg0: i32, %arg1: memref<8xi32, #tpu.memory_space<smem>>, %arg2: memref<8xi32, #tpu.memory_space<smem>>, %arg3: memref<16x128xf32, #tpu.memory_space<vmem>>, %arg4: memref<24x128xf32, #tpu.memory_space<vmem>>, %arg5: memref<8x128xf32, #tpu.memory_space<vmem>>) attributes {dimension_semantics = [#tpu.dimension_semantics<parallel>], iteration_bounds = array<i64: 1>, scalar_prefetch = 2 : i64, scratch_operands = 0 : i64, tpu.core_type = #tpu.core_type<tc>, window_params = [{pipeline_mode = #tpu.pipeline_mode<synchronous>, transform_indices = @transform_0, window_bounds = array<i64: 16, 128>}, {pipeline_mode = #tpu.pipeline_mode<synchronous>, transform_indices = @transform_1, window_bounds = array<i64: 24, 128>}, {transform_indices = @transform_2, window_bounds = array<i64: 8, 128>}]} {
    %c8_i32 = arith.constant 8 : i32
    %0 = arith.muli %arg0, %c8_i32 : i32
    %c0_i32 = arith.constant 0 : i32
    %c8_i32_0 = arith.constant 8 : i32
    %1 = arith.muli %c0_i32, %c8_i32_0 : i32
    %2 = tpu.assume_multiple %1, 8 : i32
    %3 = arith.addi %0, %2 : i32
    %c0_i32_1 = arith.constant 0 : i32
    %4 = arith.addi %3, %c0_i32_1 : i32
    %5 = arith.index_cast %4 : i32 to index
    %6 = memref.load %arg1[%5] : memref<8xi32, #tpu.memory_space<smem>>
    %7 = arith.index_cast %6 : i32 to index
    %c0 = arith.constant 0 : index
    %8 = vector.load %arg3[%7, %c0] : memref<16x128xf32, #tpu.memory_space<vmem>>, vector<1x128xf32>
    %9 = arith.addi %0, %2 : i32
    %c1_i32 = arith.constant 1 : i32
    %10 = arith.addi %9, %c1_i32 : i32
    %11 = arith.index_cast %10 : i32 to index
    %12 = memref.load %arg1[%11] : memref<8xi32, #tpu.memory_space<smem>>
    %13 = arith.index_cast %12 : i32 to index
    %c0_2 = arith.constant 0 : index
    %14 = vector.load %arg3[%13, %c0_2] : memref<16x128xf32, #tpu.memory_space<vmem>>, vector<1x128xf32>
    %15 = arith.addi %0, %2 : i32
    %c2_i32 = arith.constant 2 : i32
    %16 = arith.addi %15, %c2_i32 : i32
    %17 = arith.index_cast %16 : i32 to index
    %18 = memref.load %arg1[%17] : memref<8xi32, #tpu.memory_space<smem>>
    %19 = arith.index_cast %18 : i32 to index
    %c0_3 = arith.constant 0 : index
    %20 = vector.load %arg3[%19, %c0_3] : memref<16x128xf32, #tpu.memory_space<vmem>>, vector<1x128xf32>
    %21 = arith.addi %0, %2 : i32
    %c3_i32 = arith.constant 3 : i32
    %22 = arith.addi %21, %c3_i32 : i32
    %23 = arith.index_cast %22 : i32 to index
    %24 = memref.load %arg1[%23] : memref<8xi32, #tpu.memory_space<smem>>
    %25 = arith.index_cast %24 : i32 to index
    %c0_4 = arith.constant 0 : index
    %26 = vector.load %arg3[%25, %c0_4] : memref<16x128xf32, #tpu.memory_space<vmem>>, vector<1x128xf32>
    %27 = arith.addi %0, %2 : i32
    %c4_i32 = arith.constant 4 : i32
    %28 = arith.addi %27, %c4_i32 : i32
    %29 = arith.index_cast %28 : i32 to index
    %30 = memref.load %arg1[%29] : memref<8xi32, #tpu.memory_space<smem>>
    %31 = arith.index_cast %30 : i32 to index
    %c0_5 = arith.constant 0 : index
    %32 = vector.load %arg3[%31, %c0_5] : memref<16x128xf32, #tpu.memory_space<vmem>>, vector<1x128xf32>
    %33 = arith.addi %0, %2 : i32
    %c5_i32 = arith.constant 5 : i32
    %34 = arith.addi %33, %c5_i32 : i32
    %35 = arith.index_cast %34 : i32 to index
    %36 = memref.load %arg1[%35] : memref<8xi32, #tpu.memory_space<smem>>
    %37 = arith.index_cast %36 : i32 to index
    %c0_6 = arith.constant 0 : index
    %38 = vector.load %arg3[%37, %c0_6] : memref<16x128xf32, #tpu.memory_space<vmem>>, vector<1x128xf32>
    %39 = arith.addi %0, %2 : i32
    %c6_i32 = arith.constant 6 : i32
    %40 = arith.addi %39, %c6_i32 : i32
    %41 = arith.index_cast %40 : i32 to index
    %42 = memref.load %arg1[%41] : memref<8xi32, #tpu.memory_space<smem>>
    %43 = arith.index_cast %42 : i32 to index
    %c0_7 = arith.constant 0 : index
    %44 = vector.load %arg3[%43, %c0_7] : memref<16x128xf32, #tpu.memory_space<vmem>>, vector<1x128xf32>
    %45 = arith.addi %0, %2 : i32
    %c7_i32 = arith.constant 7 : i32
    %46 = arith.addi %45, %c7_i32 : i32
    %47 = arith.index_cast %46 : i32 to index
    %48 = memref.load %arg1[%47] : memref<8xi32, #tpu.memory_space<smem>>
    %49 = arith.index_cast %48 : i32 to index
    %c0_8 = arith.constant 0 : index
    %50 = vector.load %arg3[%49, %c0_8] : memref<16x128xf32, #tpu.memory_space<vmem>>, vector<1x128xf32>
    %51 = arith.addi %0, %2 : i32
    %c0_i32_9 = arith.constant 0 : i32
    %52 = arith.addi %51, %c0_i32_9 : i32
    %53 = arith.index_cast %52 : i32 to index
    %54 = memref.load %arg2[%53] : memref<8xi32, #tpu.memory_space<smem>>
    %55 = arith.index_cast %54 : i32 to index
    %c0_10 = arith.constant 0 : index
    %56 = vector.load %arg4[%55, %c0_10] : memref<24x128xf32, #tpu.memory_space<vmem>>, vector<1x128xf32>
    %57 = arith.addi %0, %2 : i32
    %c1_i32_11 = arith.constant 1 : i32
    %58 = arith.addi %57, %c1_i32_11 : i32
    %59 = arith.index_cast %58 : i32 to index
    %60 = memref.load %arg2[%59] : memref<8xi32, #tpu.memory_space<smem>>
    %61 = arith.index_cast %60 : i32 to index
    %c0_12 = arith.constant 0 : index
    %62 = vector.load %arg4[%61, %c0_12] : memref<24x128xf32, #tpu.memory_space<vmem>>, vector<1x128xf32>
    %63 = arith.addi %0, %2 : i32
    %c2_i32_13 = arith.constant 2 : i32
    %64 = arith.addi %63, %c2_i32_13 : i32
    %65 = arith.index_cast %64 : i32 to index
    %66 = memref.load %arg2[%65] : memref<8xi32, #tpu.memory_space<smem>>
    %67 = arith.index_cast %66 : i32 to index
    %c0_14 = arith.constant 0 : index
    %68 = vector.load %arg4[%67, %c0_14] : memref<24x128xf32, #tpu.memory_space<vmem>>, vector<1x128xf32>
    %69 = arith.addi %0, %2 : i32
    %c3_i32_15 = arith.constant 3 : i32
    %70 = arith.addi %69, %c3_i32_15 : i32
    %71 = arith.index_cast %70 : i32 to index
    %72 = memref.load %arg2[%71] : memref<8xi32, #tpu.memory_space<smem>>
    %73 = arith.index_cast %72 : i32 to index
    %c0_16 = arith.constant 0 : index
    %74 = vector.load %arg4[%73, %c0_16] : memref<24x128xf32, #tpu.memory_space<vmem>>, vector<1x128xf32>
    %75 = arith.addi %0, %2 : i32
    %c4_i32_17 = arith.constant 4 : i32
    %76 = arith.addi %75, %c4_i32_17 : i32
    %77 = arith.index_cast %76 : i32 to index
    %78 = memref.load %arg2[%77] : memref<8xi32, #tpu.memory_space<smem>>
    %79 = arith.index_cast %78 : i32 to index
    %c0_18 = arith.constant 0 : index
    %80 = vector.load %arg4[%79, %c0_18] : memref<24x128xf32, #tpu.memory_space<vmem>>, vector<1x128xf32>
    %81 = arith.addi %0, %2 : i32
    %c5_i32_19 = arith.constant 5 : i32
    %82 = arith.addi %81, %c5_i32_19 : i32
    %83 = arith.index_cast %82 : i32 to index
    %84 = memref.load %arg2[%83] : memref<8xi32, #tpu.memory_space<smem>>
    %85 = arith.index_cast %84 : i32 to index
    %c0_20 = arith.constant 0 : index
    %86 = vector.load %arg4[%85, %c0_20] : memref<24x128xf32, #tpu.memory_space<vmem>>, vector<1x128xf32>
    %87 = arith.addi %0, %2 : i32
    %c6_i32_21 = arith.constant 6 : i32
    %88 = arith.addi %87, %c6_i32_21 : i32
    %89 = arith.index_cast %88 : i32 to index
    %90 = memref.load %arg2[%89] : memref<8xi32, #tpu.memory_space<smem>>
    %91 = arith.index_cast %90 : i32 to index
    %c0_22 = arith.constant 0 : index
    %92 = vector.load %arg4[%91, %c0_22] : memref<24x128xf32, #tpu.memory_space<vmem>>, vector<1x128xf32>
    %93 = arith.addi %0, %2 : i32
    %c7_i32_23 = arith.constant 7 : i32
    %94 = arith.addi %93, %c7_i32_23 : i32
    %95 = arith.index_cast %94 : i32 to index
    %96 = memref.load %arg2[%95] : memref<8xi32, #tpu.memory_space<smem>>
    %97 = arith.index_cast %96 : i32 to index
    %c0_24 = arith.constant 0 : index
    %98 = vector.load %arg4[%97, %c0_24] : memref<24x128xf32, #tpu.memory_space<vmem>>, vector<1x128xf32>
    %99 = tpu.concatenate %8, %14, %20, %26, %32, %38, %44, %50 in 0 : vector<1x128xf32>, vector<1x128xf32>, vector<1x128xf32>, vector<1x128xf32>, vector<1x128xf32>, vector<1x128xf32>, vector<1x128xf32>, vector<1x128xf32> -> vector<8x128xf32>
    %100 = tpu.concatenate %56, %62, %68, %74, %80, %86, %92, %98 in 0 : vector<1x128xf32>, vector<1x128xf32>, vector<1x128xf32>, vector<1x128xf32>, vector<1x128xf32>, vector<1x128xf32>, vector<1x128xf32>, vector<1x128xf32> -> vector<8x128xf32>
    %101 = arith.mulf %99, %100 : vector<8x128xf32>
    %102 = arith.mulf %101, %101 : vector<8x128xf32>
    %cst = arith.constant dense<0.000000e+00> : vector<8xf32>
    %103 = vector.multi_reduction <add>, %102, %cst [1] : vector<8x128xf32> to vector<8xf32>
    %104 = vector.shape_cast %103 : vector<8xf32> to vector<8x1xf32>
    %cst_25 = arith.constant 1.000000e-24 : f32
    %105 = vector.broadcast %cst_25 : f32 to vector<8x1xf32>
    %106 = arith.maximumf %104, %105 : vector<8x1xf32>
    %107 = math.rsqrt %106 : vector<8x1xf32>
    %108 = vector.broadcast %107 : vector<8x1xf32> to vector<8x128xf32>
    %109 = arith.mulf %101, %108 : vector<8x128xf32>
    %110 = arith.index_cast %2 : i32 to index
    %c0_26 = arith.constant 0 : index
    %111 = vector.load %arg5[%110, %c0_26] : memref<8x128xf32, #tpu.memory_space<vmem>>, vector<8x128xf32>
    tpu.vector_store %arg5[%110, %c0_26], %109 {strides = array<i32>} : memref<8x128xf32, #tpu.memory_space<vmem>>, vector<8x128xf32>,
    %c1_i32_27 = arith.constant 1 : i32
    return
  }
  func.func @transform_0(%arg0: i32, %arg1: memref<8xi32, #tpu.memory_space<smem>>, %arg2: memref<8xi32, #tpu.memory_space<smem>>) -> (i32, i32) {
    %c0_i32 = arith.constant 0 : i32
    %c0_i32_0 = arith.constant 0 : i32
    %c0_i32_1 = arith.constant 0 : i32
    return %c0_i32, %c0_i32_0 : i32, i32
  }
  func.func @transform_1(%arg0: i32, %arg1: memref<8xi32, #tpu.memory_space<smem>>, %arg2: memref<8xi32, #tpu.memory_space<smem>>) -> (i32, i32) {
    %c0_i32 = arith.constant 0 : i32
    %c0_i32_0 = arith.constant 0 : i32
    %c0_i32_1 = arith.constant 0 : i32
    return %c0_i32, %c0_i32_0 : i32, i32
  }
  func.func @transform_2(%arg0: i32, %arg1: memref<8xi32, #tpu.memory_space<smem>>, %arg2: memref<8xi32, #tpu.memory_space<smem>>) -> (i32, i32) {
    %c0_i32 = arith.constant 0 : i32
    %c0_i32_0 = arith.constant 0 : i32
    return %arg0, %c0_i32 : i32, i32
  }
}

</mosaic_0001>

<llo_original>
// kernel: tpu_custom_call.1
$region0: #{tpu_custom_call.1}
  #allocation0 [shape = 'u32[]', space=smem, size = 0x4, offset = 0x4, fixed_abs, tag = 'smem constant byte address 0x4 - core index']
  #allocation1 [shape = 'u32[144,128]{1,0:T(1,128)}', space=vmem, size = 0x12000, scoped, tag = 'internal scratch']
  #allocation2 [shape = 's32[1]{0}', space=sflag, size = 0x4, scoped, tag = 'scoped memory for tpu_custom_call.1']
  #allocation3 [shape = 'u8[512]{0}', space=smem, size = 0x200, scoped, tag = 'prefetched SMEM operand 0']
  #allocation4 [shape = 'u8[512]{0}', space=smem, size = 0x200, scoped, tag = 'prefetched SMEM operand 1']
  %s0 = inlined_call_operand.hbm [shape: s32[8], index: 0, kind: input, shape index: {}]
  %s1 = inlined_call_operand.vmem [shape: s32[8], index: 1, kind: input, shape index: {}]
  %s2 = inlined_call_operand.hbm [shape: f32[16,128], index: 2, kind: input, shape index: {}]
  %s3 = inlined_call_operand.hbm [shape: f32[24,128], index: 3, kind: input, shape index: {}]
  %s4 = inlined_call_operand.hbm [shape: f32[8,128], index: 4, kind: output, shape index: {}]
  %s5 = sld [smem:[#allocation0]]
  $region26: #{tpu_custom_call.1} parent=0
    _
  %s7 = ssub.s32 1, %s5
  %s8 = scalar_select 0, %s7, %s5
  %10 = dma.hbm_to_smem %s0, 16, [#allocation3], [#allocation2]
  %s11 = sshll.u32 %s1, 4
  %s12 = int_to_ptr.vmem [resolvable:$true] %s11
  %14 = dma.vmem_to_smem %s12, 16, [#allocation4], [#allocation2]
  %15 = dma.done [#allocation2], 32
  %16 = sfence
  $region1: #{tpu_custom_call.1} parent=0
    #allocation5 [shape = 'u8[8192]{0}', space=vmem, size = 0x2000, scoped, tag = 'input window, operand 2, single buffered']
    #allocation6 [shape = 's32[1]{0}', space=sflag, size = 0x4, scoped, tag = 'scoped memory for tpu_custom_call.1']
    #allocation7 [shape = 's32[1]{0}', space=sflag, size = 0x4, scoped, tag = 'scoped memory for tpu_custom_call.1']
    #allocation8 [shape = 'u8[12288]{0}', space=vmem, size = 0x3000, scoped, tag = 'input window, operand 3, single buffered']
    #allocation9 [shape = 's32[1]{0}', space=sflag, size = 0x4, scoped, tag = 'scoped memory for tpu_custom_call.1']
    #allocation10 [shape = 'u8[4096]{0}', space=vmem, size = 0x1000, scoped, tag = 'output window, operand 0, single buffered']
    %17 = vsyncpa [#allocation6], 0
    %18 = vsyncpa [#allocation9], 0
    %19 = vsyncpa [#allocation7], 0
    // Predicated region
    $region2: #{tpu_custom_call.1} parent=1 // pred_check
      _
    $region3: #{tpu_custom_call.1} parent=1 // pred_check_branch
      %21 = sbr.rel (0) target = $region5
    $region4: #{tpu_custom_call.1} parent=1 // pred_region
      %s23 = ssub.s32 256, 256
      %24 = vsyncadd [#allocation6], %s23
      %s25 = sshll.u32 [#allocation5], 4
      %s26 = int_to_ptr.vmem [resolvable:$true] %s25
      %31 = dma.hbm_to_vmem [thread:$0]  %s2, 256, %s26, [#allocation6], 128, 128, 8
    $region5: #{tpu_custom_call.1} parent=1 // pred_fallthru
      _
    // Predicated region
    $region6: #{tpu_custom_call.1} parent=1 // pred_check
      _
    $region7: #{tpu_custom_call.1} parent=1 // pred_check_branch
      %33 = sbr.rel (0) target = $region9
    $region8: #{tpu_custom_call.1} parent=1 // pred_region
      %s35 = ssub.s32 384, 384
      %36 = vsyncadd [#allocation9], %s35
      %s37 = sshll.u32 [#allocation8], 4
      %s38 = int_to_ptr.vmem [resolvable:$true] %s37
      %43 = dma.hbm_to_vmem [thread:$0]  %s3, 384, %s38, [#allocation9], 128, 128, 8
    $region9: #{tpu_custom_call.1} parent=1 // pred_fallthru
      _
    // Predicated region
    $region10: #{tpu_custom_call.1} parent=1 // pred_check
      _
    $region11: #{tpu_custom_call.1} parent=1 // pred_check_branch
      %45 = sbr.rel (0) target = $region13
    $region12: #{tpu_custom_call.1} parent=1 // pred_region
      %46 = dma.done [#allocation6], 256
    $region13: #{tpu_custom_call.1} parent=1 // pred_fallthru
      _
    // Predicated region
    $region14: #{tpu_custom_call.1} parent=1 // pred_check
      _
    $region15: #{tpu_custom_call.1} parent=1 // pred_check_branch
      %48 = sbr.rel (0) target = $region17
    $region16: #{tpu_custom_call.1} parent=1 // pred_region
      %49 = dma.done [#allocation9], 384
    $region17: #{tpu_custom_call.1} parent=1 // pred_fallthru
      _
    %s50 = smul.u32 0, 8
    %s51 = sadd.s32 %s50, 0
    %s52 = sld [smem:[#allocation3 + %s51]]
    %s53 = scalar_lea.vmem [#allocation5], %s52
    %v54 = vld [vmem:[%s53] sm:$0x1]
    %s55 = sadd.s32 %s51, 1
    %s56 = sld [smem:[#allocation3 + %s55]]
    %s57 = scalar_lea.vmem [#allocation5], %s56
    %v58 = vld [vmem:[%s57] sm:$0x1]
    %s59 = sadd.s32 %s51, 2
    %s60 = sld [smem:[#allocation3 + %s59]]
    %s61 = scalar_lea.vmem [#allocation5], %s60
    %v62 = vld [vmem:[%s61] sm:$0x1]
    %s63 = sadd.s32 %s51, 3
    %s64 = sld [smem:[#allocation3 + %s63]]
    %s65 = scalar_lea.vmem [#allocation5], %s64
    %v66 = vld [vmem:[%s65] sm:$0x1]
    %s67 = sadd.s32 %s51, 4
    %s68 = sld [smem:[#allocation3 + %s67]]
    %s69 = scalar_lea.vmem [#allocation5], %s68
    %v70 = vld [vmem:[%s69] sm:$0x1]
    %s71 = sadd.s32 %s51, 5
    %s72 = sld [smem:[#allocation3 + %s71]]
    %s73 = scalar_lea.vmem [#allocation5], %s72
    %v74 = vld [vmem:[%s73] sm:$0x1]
    %s75 = sadd.s32 %s51, 6
    %s76 = sld [smem:[#allocation3 + %s75]]
    %s77 = scalar_lea.vmem [#allocation5], %s76
    %v78 = vld [vmem:[%s77] sm:$0x1]
    %s79 = sadd.s32 %s51, 7
    %s80 = sld [smem:[#allocation3 + %s79]]
    %s81 = scalar_lea.vmem [#allocation5], %s80
    %v82 = vld [vmem:[%s81] sm:$0x1]
    %s83 = sld [smem:[#allocation4 + %s51]]
    %s84 = scalar_lea.vmem [#allocation8], %s83
    %v85 = vld [vmem:[%s84] sm:$0x1]
    %s86 = sld [smem:[#allocation4 + %s55]]
    %s87 = scalar_lea.vmem [#allocation8], %s86
    %v88 = vld [vmem:[%s87] sm:$0x1]
    %s89 = sld [smem:[#allocation4 + %s59]]
    %s90 = scalar_lea.vmem [#allocation8], %s89
    %v91 = vld [vmem:[%s90] sm:$0x1]
    %s92 = sld [smem:[#allocation4 + %s63]]
    %s93 = scalar_lea.vmem [#allocation8], %s92
    %v94 = vld [vmem:[%s93] sm:$0x1]
    %s95 = sld [smem:[#allocation4 + %s67]]
    %s96 = scalar_lea.vmem [#allocation8], %s95
    %v97 = vld [vmem:[%s96] sm:$0x1]
    %s98 = sld [smem:[#allocation4 + %s71]]
    %s99 = scalar_lea.vmem [#allocation8], %s98
    %v100 = vld [vmem:[%s99] sm:$0x1]
    %s101 = sld [smem:[#allocation4 + %s75]]
    %s102 = scalar_lea.vmem [#allocation8], %s101
    %v103 = vld [vmem:[%s102] sm:$0x1]
    %s104 = sld [smem:[#allocation4 + %s79]]
    %s105 = scalar_lea.vmem [#allocation8], %s104
    %v106 = vld [vmem:[%s105] sm:$0x1]
    %v108 = vrot.slane %v58, 7
    %v111 = vrot.slane %v62, 6
    %v114 = vrot.slane %v66, 5
    %v117 = vrot.slane %v70, 4
    %v120 = vrot.slane %v74, 3
    %v123 = vrot.slane %v78, 2
    %v126 = vrot.slane %v82, 1
    %vm128 = vcmask 1040384
    %v129 = vsel %vm128, %v54, %v108
    %vm130 = vcmask 1041408
    %v131 = vsel %vm130, %v129, %v111
    %vm132 = vcmask 1042432
    %v133 = vsel %vm132, %v131, %v114
    %vm134 = vcmask 1043456
    %v135 = vsel %vm134, %v133, %v117
    %vm136 = vcmask 1044480
    %v137 = vsel %vm136, %v135, %v120
    %vm138 = vcmask 1045504
    %v139 = vsel %vm138, %v137, %v123
    %vm140 = vcmask 1046528
    %v141 = vsel %vm140, %v139, %v126
    %v143 = vrot.slane %v88, 7
    %v146 = vrot.slane %v91, 6
    %v149 = vrot.slane %v94, 5
    %v152 = vrot.slane %v97, 4
    %v155 = vrot.slane %v100, 3
    %v158 = vrot.slane %v103, 2
    %v161 = vrot.slane %v106, 1
    %v163 = vsel %vm128, %v85, %v143
    %v164 = vsel %vm130, %v163, %v146
    %v165 = vsel %vm132, %v164, %v149
    %v166 = vsel %vm134, %v165, %v152
    %v167 = vsel %vm136, %v166, %v155
    %v168 = vsel %vm138, %v167, %v158
    %v169 = vsel %vm140, %v168, %v161
    %v170 = vmul.f32 %v141, %v169
    %v171 = vmul.f32 %v170, %v170
    %172 = vadd.xlane.f32.xlu0 %v171
    %v173 = vpop.xlane.xlu0 %172
    %v174 = vmax.f32 %v173, 1e-24
    %v175 = vrsqrt.pop %v174
    %v176 = vmul.f32 %v170, %v175
    %177 = vst [vmem:[#allocation10] sm:$0xff] %v176
    // Predicated region
    $region18: #{tpu_custom_call.1} parent=1 // pred_check
      _
    $region19: #{tpu_custom_call.1} parent=1 // pred_check_branch
      %179 = sbr.rel (0) target = $region21
    $region20: #{tpu_custom_call.1} parent=1 // pred_region
      %s181 = ssub.s32 128, 128
      %182 = vsyncadd [#allocation7], %s181
      %s184 = sshll.u32 [#allocation10], 4
      %s185 = int_to_ptr.vmem [resolvable:$true] %s184
      %187 = dma.vmem_to_hbm [thread:$0]  %s185, 128, %s4, [#allocation7]
    $region21: #{tpu_custom_call.1} parent=1 // pred_fallthru
      _
    // Predicated region
    $region22: #{tpu_custom_call.1} parent=1 // pred_check
      _
    $region23: #{tpu_custom_call.1} parent=1 // pred_check_branch
      %189 = sbr.rel (0) target = $region25
    $region24: #{tpu_custom_call.1} parent=1 // pred_region
      %190 = dma.done [#allocation7], 128
    $region25: #{tpu_custom_call.1} parent=1 // pred_fallthru
      _
    %191 = vsyncpa [#allocation6], 1
    %192 = vsyncpa [#allocation9], 1
    %193 = vsyncpa [#allocation7], 1

</llo_original>
